<compile_context>
chip_gen: v7x
topology: tpu7x:2x2x1
jax: 0.10.0
libtpu: 0.0.40
codegen_flags: <defaults>
</compile_context>

<pallas_src>
import functools

import jax
import jax.numpy as jnp
from jax.experimental import pallas as pl
from jax.experimental.pallas import tpu as pltpu  # noqa: F401  (kept for TPU backend use)


def rnn_loop_kernel(slab_ref, out_ref, *, T, B, F, O):
    """Whole RNN loop in one gridless kernel invocation.

    slab_ref : (T*B + F + 1, F) f32
               rows [0 : T*B)        = xs flattened to (T*B, F)
               rows [T*B : T*B+F)    = W.T  (F, O)
               row  [T*B+F]          = bias (1, O)
    out_ref  : (B, O) f32 -- final hidden state (y == h)
    """
    slab = slab_ref[...]

    xs2d = slab[0:T * B, :]                      # (T*B, F) static view
    wt = slab[T * B:T * B + F, :]                # (F, O)   = W.T
    bias = slab[T * B + F:T * B + F + 1, :]      # (1, O)

    # ---- hoisted, x-only work (independent of h) --------------------------
    # One tiny MXU matmul for all timesteps; bias added once (implicit bcast).
    z = jnp.dot(xs2d, wt, preferred_element_type=jnp.float32) + bias  # (T*B, O)

    # ---- serial recurrence: fully unrolled; critical path = T x (add+tanh) -
    # The gate depends only on z, so after unrolling its reductions can be
    # scheduled under earlier tanh latencies.
    h = jnp.zeros((B, O), jnp.float32)
    for t in range(T):                                   # static unroll, T = 8
        zt = z[t * B:(t + 1) * B, :]                     # (B, O) static slice
        s = jnp.sum(zt, keepdims=True)                   # (1, 1) full-block sum
        zt = jnp.where(s > 0, zt, -zt)                   # MyDecisionGate
        h = jnp.tanh(zt + h)                             # MyCell

    out_ref[...] = h.astype(out_ref.dtype)


def my_rnn_loop(xs, w, b):
    """xs: (T, B, F) f32; w: (O, F) f32; b: (O,) f32 -> (y, h), each (B, O)."""
    T, B, F = xs.shape
    O = w.shape[0]
    assert F == O, "slab packing relies on nn.Linear(4, 4) having F == O"

    # Pack all three inputs into ONE slab -> a single input DMA.
    slab = jnp.concatenate(
        [
            xs.reshape(T * B, F).astype(jnp.float32),     # (T*B, F)
            jnp.transpose(w).astype(jnp.float32),         # (F, O) = W.T
            b.reshape(1, O).astype(jnp.float32),          # (1, O)
        ],
        axis=0,
    )                                                     # (T*B + F + 1, F)
    rows = T * B + F + 1

    h = pl.pallas_call(
        functools.partial(rnn_loop_kernel, T=T, B=B, F=F, O=O),
        out_shape=jax.ShapeDtypeStruct((B, O), jnp.float32),
        # No grid: one invocation, whole slab resident in VMEM (<1 KiB).
        in_specs=[pl.BlockSpec((rows, F), lambda: (0, 0))],
        out_specs=pl.BlockSpec((B, O), lambda: (0, 0)),   # single output
        cost_estimate=pl.CostEstimate(
            flops=2 * T * B * F * O,
            transcendentals=T * B * O,
            bytes_accessed=rows * F * 4 + B * O * 4,
        ),
    )(slab)

    # MyCell returns (new_h, new_h): y and h are bit-identical -> duplicate here.
    return h, h


def my_rnn_loop_ref(xs, w, b):
    """Pure-JAX reference of MyRNNLoop.forward."""
    def step(h, x):
        z = x @ w.T + b
        z = jnp.where(jnp.sum(z) > 0, z, -z)
        h_new = jnp.tanh(z + h)
        return h_new, None

    h0 = jnp.zeros((xs.shape[1], w.shape[0]), jnp.float32)
    h_final, _ = jax.lax.scan(step, h0, xs)
    return h_final, h_final


if __name__ == "__main__":
    key = jax.random.PRNGKey(0)
    k_x, k_w, k_b = jax.random.split(key, 3)

    T, B, F, O = 8, 3, 4, 4
    xs = jax.random.normal(k_x, (T, B, F), dtype=jnp.float32)
    w = jax.random.normal(k_w, (O, F), dtype=jnp.float32) * 0.5   # nn.Linear(4,4).weight
    b = jax.random.normal(k_b, (O,), dtype=jnp.float32) * 0.1     # nn.Linear(4,4).bias

    y, h = my_rnn_loop(xs, w, b)
    y = jax.block_until_ready(y)
    h = jax.block_until_ready(h)

    y_ref, h_ref = my_rnn_loop_ref(xs, w, b)
    assert y.shape == (B, O) and h.shape == (B, O)
    assert jnp.allclose(y, y_ref, atol=1e-5, rtol=1e-5), (y, y_ref)
    assert jnp.allclose(h, h_ref, atol=1e-5, rtol=1e-5), (h, h_ref)

    print("KERNEL_OK")
</pallas_src>

<mosaic_0001>
module attributes {stable_mosaic.version = 11 : i64} {
  func.func @rnn_loop_kernel(%arg0: memref<29x4xf32, #tpu.memory_space<vmem>>, %arg1: memref<3x4xf32, #tpu.memory_space<vmem>>) attributes {dimension_semantics = [], scalar_prefetch = 0 : i64, scratch_operands = 0 : i64, tpu.core_type = #tpu.core_type<tc>} {
    %c0 = arith.constant 0 : index
    %c0_0 = arith.constant 0 : index
    %0 = vector.load %arg0[%c0, %c0_0] : memref<29x4xf32, #tpu.memory_space<vmem>>, vector<29x4xf32>
    %1 = vector.extract_strided_slice %0 {offsets = [0, 0], sizes = [24, 4], strides = [1, 1]} : vector<29x4xf32> to vector<24x4xf32>
    %2 = vector.extract_strided_slice %0 {offsets = [24, 0], sizes = [4, 4], strides = [1, 1]} : vector<29x4xf32> to vector<4x4xf32>
    %3 = vector.extract_strided_slice %0 {offsets = [28, 0], sizes = [1, 4], strides = [1, 1]} : vector<29x4xf32> to vector<1x4xf32>
    %cst = arith.constant dense<0.000000e+00> : vector<24x4xf32>
    %4 = tpu.matmul %1, %2, %cst {dimension_numbers = #tpu.dot_dimension_numbers<[1], [0], [0], [1], [0, 0, 1, 1], [], []>} : vector<24x4xf32>, vector<4x4xf32>, vector<24x4xf32> -> vector<24x4xf32>
    %5 = vector.broadcast %3 : vector<1x4xf32> to vector<24x4xf32>
    %6 = arith.addf %4, %5 : vector<24x4xf32>
    %cst_1 = arith.constant 0.000000e+00 : f32
    %7 = vector.broadcast %cst_1 : f32 to vector<3x4xf32>
    %8 = vector.extract_strided_slice %6 {offsets = [0, 0], sizes = [3, 4], strides = [1, 1]} : vector<24x4xf32> to vector<3x4xf32>
    %9 = vector.shape_cast %8 : vector<3x4xf32> to vector<1x3x4xf32>
    %cst_2 = arith.constant dense<0.000000e+00> : vector<1xf32>
    %10 = vector.multi_reduction <add>, %9, %cst_2 [1, 2] : vector<1x3x4xf32> to vector<1xf32>
    %11 = vector.shape_cast %10 : vector<1xf32> to vector<1x1x1xf32>
    %12 = vector.extract %11[0, 0, 0] : f32 from vector<1x1x1xf32>
    %13 = vector.broadcast %12 : f32 to vector<1x1xf32>
    %cst_3 = arith.constant 0.000000e+00 : f32
    %14 = vector.broadcast %cst_3 : f32 to vector<1x1xf32>
    %15 = arith.cmpf ogt, %13, %14 : vector<1x1xf32>
    %cst_4 = arith.constant 0.000000e+00 : f32
    %16 = vector.broadcast %cst_4 : f32 to vector<3x4xf32>
    %17 = arith.subf %16, %8 : vector<3x4xf32>
    %18 = vector.shape_cast %15 : vector<1x1xi1> to vector<1x1xi1>
    %19 = vector.broadcast %18 : vector<1x1xi1> to vector<3x4xi1>
    %20 = arith.select %19, %8, %17 : vector<3x4xi1>, vector<3x4xf32>
    %21 = arith.addf %20, %7 : vector<3x4xf32>
    %22 = math.tanh %21 : vector<3x4xf32>
    %23 = vector.extract_strided_slice %6 {offsets = [3, 0], sizes = [3, 4], strides = [1, 1]} : vector<24x4xf32> to vector<3x4xf32>
    %24 = vector.shape_cast %23 : vector<3x4xf32> to vector<1x3x4xf32>
    %cst_5 = arith.constant dense<0.000000e+00> : vector<1xf32>
    %25 = vector.multi_reduction <add>, %24, %cst_5 [1, 2] : vector<1x3x4xf32> to vector<1xf32>
    %26 = vector.shape_cast %25 : vector<1xf32> to vector<1x1x1xf32>
    %27 = vector.extract %26[0, 0, 0] : f32 from vector<1x1x1xf32>
    %28 = vector.broadcast %27 : f32 to vector<1x1xf32>
    %cst_6 = arith.constant 0.000000e+00 : f32
    %29 = vector.broadcast %cst_6 : f32 to vector<1x1xf32>
    %30 = arith.cmpf ogt, %28, %29 : vector<1x1xf32>
    %cst_7 = arith.constant 0.000000e+00 : f32
    %31 = vector.broadcast %cst_7 : f32 to vector<3x4xf32>
    %32 = arith.subf %31, %23 : vector<3x4xf32>
    %33 = vector.shape_cast %30 : vector<1x1xi1> to vector<1x1xi1>
    %34 = vector.broadcast %33 : vector<1x1xi1> to vector<3x4xi1>
    %35 = arith.select %34, %23, %32 : vector<3x4xi1>, vector<3x4xf32>
    %36 = arith.addf %35, %22 : vector<3x4xf32>
    %37 = math.tanh %36 : vector<3x4xf32>
    %38 = vector.extract_strided_slice %6 {offsets = [6, 0], sizes = [3, 4], strides = [1, 1]} : vector<24x4xf32> to vector<3x4xf32>
    %39 = vector.shape_cast %38 : vector<3x4xf32> to vector<1x3x4xf32>
    %cst_8 = arith.constant dense<0.000000e+00> : vector<1xf32>
    %40 = vector.multi_reduction <add>, %39, %cst_8 [1, 2] : vector<1x3x4xf32> to vector<1xf32>
    %41 = vector.shape_cast %40 : vector<1xf32> to vector<1x1x1xf32>
    %42 = vector.extract %41[0, 0, 0] : f32 from vector<1x1x1xf32>
    %43 = vector.broadcast %42 : f32 to vector<1x1xf32>
    %cst_9 = arith.constant 0.000000e+00 : f32
    %44 = vector.broadcast %cst_9 : f32 to vector<1x1xf32>
    %45 = arith.cmpf ogt, %43, %44 : vector<1x1xf32>
    %cst_10 = arith.constant 0.000000e+00 : f32
    %46 = vector.broadcast %cst_10 : f32 to vector<3x4xf32>
    %47 = arith.subf %46, %38 : vector<3x4xf32>
    %48 = vector.shape_cast %45 : vector<1x1xi1> to vector<1x1xi1>
    %49 = vector.broadcast %48 : vector<1x1xi1> to vector<3x4xi1>
    %50 = arith.select %49, %38, %47 : vector<3x4xi1>, vector<3x4xf32>
    %51 = arith.addf %50, %37 : vector<3x4xf32>
    %52 = math.tanh %51 : vector<3x4xf32>
    %53 = vector.extract_strided_slice %6 {offsets = [9, 0], sizes = [3, 4], strides = [1, 1]} : vector<24x4xf32> to vector<3x4xf32>
    %54 = vector.shape_cast %53 : vector<3x4xf32> to vector<1x3x4xf32>
    %cst_11 = arith.constant dense<0.000000e+00> : vector<1xf32>
    %55 = vector.multi_reduction <add>, %54, %cst_11 [1, 2] : vector<1x3x4xf32> to vector<1xf32>
    %56 = vector.shape_cast %55 : vector<1xf32> to vector<1x1x1xf32>
    %57 = vector.extract %56[0, 0, 0] : f32 from vector<1x1x1xf32>
    %58 = vector.broadcast %57 : f32 to vector<1x1xf32>
    %cst_12 = arith.constant 0.000000e+00 : f32
    %59 = vector.broadcast %cst_12 : f32 to vector<1x1xf32>
    %60 = arith.cmpf ogt, %58, %59 : vector<1x1xf32>
    %cst_13 = arith.constant 0.000000e+00 : f32
    %61 = vector.broadcast %cst_13 : f32 to vector<3x4xf32>
    %62 = arith.subf %61, %53 : vector<3x4xf32>
    %63 = vector.shape_cast %60 : vector<1x1xi1> to vector<1x1xi1>
    %64 = vector.broadcast %63 : vector<1x1xi1> to vector<3x4xi1>
    %65 = arith.select %64, %53, %62 : vector<3x4xi1>, vector<3x4xf32>
    %66 = arith.addf %65, %52 : vector<3x4xf32>
    %67 = math.tanh %66 : vector<3x4xf32>
    %68 = vector.extract_strided_slice %6 {offsets = [12, 0], sizes = [3, 4], strides = [1, 1]} : vector<24x4xf32> to vector<3x4xf32>
    %69 = vector.shape_cast %68 : vector<3x4xf32> to vector<1x3x4xf32>
    %cst_14 = arith.constant dense<0.000000e+00> : vector<1xf32>
    %70 = vector.multi_reduction <add>, %69, %cst_14 [1, 2] : vector<1x3x4xf32> to vector<1xf32>
    %71 = vector.shape_cast %70 : vector<1xf32> to vector<1x1x1xf32>
    %72 = vector.extract %71[0, 0, 0] : f32 from vector<1x1x1xf32>
    %73 = vector.broadcast %72 : f32 to vector<1x1xf32>
    %cst_15 = arith.constant 0.000000e+00 : f32
    %74 = vector.broadcast %cst_15 : f32 to vector<1x1xf32>
    %75 = arith.cmpf ogt, %73, %74 : vector<1x1xf32>
    %cst_16 = arith.constant 0.000000e+00 : f32
    %76 = vector.broadcast %cst_16 : f32 to vector<3x4xf32>
    %77 = arith.subf %76, %68 : vector<3x4xf32>
    %78 = vector.shape_cast %75 : vector<1x1xi1> to vector<1x1xi1>
    %79 = vector.broadcast %78 : vector<1x1xi1> to vector<3x4xi1>
    %80 = arith.select %79, %68, %77 : vector<3x4xi1>, vector<3x4xf32>
    %81 = arith.addf %80, %67 : vector<3x4xf32>
    %82 = math.tanh %81 : vector<3x4xf32>
    %83 = vector.extract_strided_slice %6 {offsets = [15, 0], sizes = [3, 4], strides = [1, 1]} : vector<24x4xf32> to vector<3x4xf32>
    %84 = vector.shape_cast %83 : vector<3x4xf32> to vector<1x3x4xf32>
    %cst_17 = arith.constant dense<0.000000e+00> : vector<1xf32>
    %85 = vector.multi_reduction <add>, %84, %cst_17 [1, 2] : vector<1x3x4xf32> to vector<1xf32>
    %86 = vector.shape_cast %85 : vector<1xf32> to vector<1x1x1xf32>
    %87 = vector.extract %86[0, 0, 0] : f32 from vector<1x1x1xf32>
    %88 = vector.broadcast %87 : f32 to vector<1x1xf32>
    %cst_18 = arith.constant 0.000000e+00 : f32
    %89 = vector.broadcast %cst_18 : f32 to vector<1x1xf32>
    %90 = arith.cmpf ogt, %88, %89 : vector<1x1xf32>
    %cst_19 = arith.constant 0.000000e+00 : f32
    %91 = vector.broadcast %cst_19 : f32 to vector<3x4xf32>
    %92 = arith.subf %91, %83 : vector<3x4xf32>
    %93 = vector.shape_cast %90 : vector<1x1xi1> to vector<1x1xi1>
    %94 = vector.broadcast %93 : vector<1x1xi1> to vector<3x4xi1>
    %95 = arith.select %94, %83, %92 : vector<3x4xi1>, vector<3x4xf32>
    %96 = arith.addf %95, %82 : vector<3x4xf32>
    %97 = math.tanh %96 : vector<3x4xf32>
    %98 = vector.extract_strided_slice %6 {offsets = [18, 0], sizes = [3, 4], strides = [1, 1]} : vector<24x4xf32> to vector<3x4xf32>
    %99 = vector.shape_cast %98 : vector<3x4xf32> to vector<1x3x4xf32>
    %cst_20 = arith.constant dense<0.000000e+00> : vector<1xf32>
    %100 = vector.multi_reduction <add>, %99, %cst_20 [1, 2] : vector<1x3x4xf32> to vector<1xf32>
    %101 = vector.shape_cast %100 : vector<1xf32> to vector<1x1x1xf32>
    %102 = vector.extract %101[0, 0, 0] : f32 from vector<1x1x1xf32>
    %103 = vector.broadcast %102 : f32 to vector<1x1xf32>
    %cst_21 = arith.constant 0.000000e+00 : f32
    %104 = vector.broadcast %cst_21 : f32 to vector<1x1xf32>
    %105 = arith.cmpf ogt, %103, %104 : vector<1x1xf32>
    %cst_22 = arith.constant 0.000000e+00 : f32
    %106 = vector.broadcast %cst_22 : f32 to vector<3x4xf32>
    %107 = arith.subf %106, %98 : vector<3x4xf32>
    %108 = vector.shape_cast %105 : vector<1x1xi1> to vector<1x1xi1>
    %109 = vector.broadcast %108 : vector<1x1xi1> to vector<3x4xi1>
    %110 = arith.select %109, %98, %107 : vector<3x4xi1>, vector<3x4xf32>
    %111 = arith.addf %110, %97 : vector<3x4xf32>
    %112 = math.tanh %111 : vector<3x4xf32>
    %113 = vector.extract_strided_slice %6 {offsets = [21, 0], sizes = [3, 4], strides = [1, 1]} : vector<24x4xf32> to vector<3x4xf32>
    %114 = vector.shape_cast %113 : vector<3x4xf32> to vector<1x3x4xf32>
    %cst_23 = arith.constant dense<0.000000e+00> : vector<1xf32>
    %115 = vector.multi_reduction <add>, %114, %cst_23 [1, 2] : vector<1x3x4xf32> to vector<1xf32>
    %116 = vector.shape_cast %115 : vector<1xf32> to vector<1x1x1xf32>
    %117 = vector.extract %116[0, 0, 0] : f32 from vector<1x1x1xf32>
    %118 = vector.broadcast %117 : f32 to vector<1x1xf32>
    %cst_24 = arith.constant 0.000000e+00 : f32
    %119 = vector.broadcast %cst_24 : f32 to vector<1x1xf32>
    %120 = arith.cmpf ogt, %118, %119 : vector<1x1xf32>
    %cst_25 = arith.constant 0.000000e+00 : f32
    %121 = vector.broadcast %cst_25 : f32 to vector<3x4xf32>
    %122 = arith.subf %121, %113 : vector<3x4xf32>
    %123 = vector.shape_cast %120 : vector<1x1xi1> to vector<1x1xi1>
    %124 = vector.broadcast %123 : vector<1x1xi1> to vector<3x4xi1>
    %125 = arith.select %124, %113, %122 : vector<3x4xi1>, vector<3x4xf32>
    %126 = arith.addf %125, %112 : vector<3x4xf32>
    %127 = math.tanh %126 : vector<3x4xf32>
    %c0_26 = arith.constant 0 : index
    %c0_27 = arith.constant 0 : index
    %128 = vector.load %arg1[%c0_26, %c0_27] : memref<3x4xf32, #tpu.memory_space<vmem>>, vector<3x4xf32>
    tpu.vector_store %arg1[%c0_26, %c0_27], %127 {strides = array<i32>} : memref<3x4xf32, #tpu.memory_space<vmem>>, vector<3x4xf32>,
    return
  }
}

</mosaic_0001>

<llo_original>
// kernel: tpu_custom_call.1
$region0: #{tpu_custom_call.1}
  #allocation0 [shape = 'u32[]', space=smem, size = 0x4, offset = 0x4, fixed_abs, tag = 'smem constant byte address 0x4 - core index']
  #allocation1 [shape = 'u32[144,128]{1,0:T(1,128)}', space=vmem, size = 0x12000, scoped, tag = 'internal scratch']
  %s0 = inlined_call_operand.vmem [shape: f32[29,4], index: 0, kind: input, shape index: {}]
  %s1 = inlined_call_operand.hbm [shape: f32[3,4], index: 1, kind: output, shape index: {}]
  %s2 = sld [smem:[#allocation0]]
  $region14: #{tpu_custom_call.1} parent=0
    _
  %s4 = ssub.s32 1, %s2
  %s5 = scalar_select 0, %s4, %s2
  $region1: #{tpu_custom_call.1} parent=0
    #allocation2 [shape = 'u8[2048]{0}', space=vmem, size = 0x800, scoped, tag = 'output window, operand 0, single buffered']
    #allocation3 [shape = 's32[1]{0}', space=sflag, size = 0x4, scoped, tag = 'scoped memory for tpu_custom_call.1']
    %6 = vsyncpa [#allocation3], 0
    // Predicated region
    $region2: #{tpu_custom_call.1} parent=1 // pred_check
      _
    $region3: #{tpu_custom_call.1} parent=1 // pred_check_branch
      %8 = sbr.rel (0) target = $region5
    $region4: #{tpu_custom_call.1} parent=1 // pred_region
      _
    $region5: #{tpu_custom_call.1} parent=1 // pred_fallthru
      _
    %v9 = vld [vmem:[%s0] sm:$0xff]
    %v10 = vld [vmem:[%s0 + $0x8] sm:$0xff]
    %v11 = vld [vmem:[%s0 + $0x10] sm:$0xff]
    %v12 = vld [vmem:[%s0 + $0x18] sm:$0x1f]
    %v13 = vlaneseq
    %v14 = vshrl.u32 %v13, 7
    %v15 = vsub.s32 4, %v14
    %v16 = vrot.slane %v12, %v15
    %vm17 = vcmask 31744
    %v19 = vsel %vm17, %v9, 0
    %v22 = vsel %vm17, %v10, 0
    %v25 = vsel %vm17, %v11, 0
    %vm27 = vcmask 1043456
    %v29 = vsel %vm27, %v12, 0
    %31 = vmatprep.subr.mxu0 0.0
    %32 = vmatpush1.msra.mxu0 %v29
    %33 = vmatprep.subr.mxu0 0.0
    %34 = vmatpush1.msra.mxu0 0.0
    %35 = vmatprep.subr.mxu0 0.0
    %36 = vmatpush1.msra.mxu0 0.0
    %37 = vmatprep.subr.mxu0 0.0
    %38 = vmatpush1.msra.mxu0 0.0
    %39 = vmatprep.subr.mxu0 0.0
    %40 = vmatpush1.msra.mxu0 0.0
    %41 = vmatprep.subr.mxu0 0.0
    %42 = vmatpush1.msra.mxu0 0.0
    %43 = vmatprep.subr.mxu0 0.0
    %44 = vmatpush1.msra.mxu0 0.0
    %45 = vmatprep.subr.mxu0 0.0
    %46 = vmatpush1.msra.mxu0 0.0
    %47 = vmatprep.subr.mxu0 0.0
    %48 = vmatpush1.msra.mxu0 0.0
    %49 = vmatprep.subr.mxu0 0.0
    %50 = vmatpush1.msra.mxu0 0.0
    %51 = vmatprep.subr.mxu0 0.0
    %52 = vmatpush1.msra.mxu0 0.0
    %53 = vmatprep.subr.mxu0 0.0
    %54 = vmatpush1.msra.mxu0 0.0
    %55 = vmatprep.subr.mxu0 0.0
    %56 = vmatpush1.msra.mxu0 0.0
    %57 = vmatprep.subr.mxu0 0.0
    %58 = vmatpush1.msra.mxu0 0.0
    %59 = vmatprep.subr.mxu0 0.0
    %60 = vmatpush1.msra.mxu0 0.0
    %61 = vmatprep.subr.mxu0 0.0
    %62 = vmatpush1.msra.mxu0 0.0
    %63 = vmatprep.subr.mxu0 0.0
    %64 = vmatpush1.msra.mxu0 0.0
    %65 = vmatprep.subr.mxu0 0.0
    %66 = vmatpush1.msra.mxu0 0.0
    %67 = vmatprep.subr.mxu0 0.0
    %68 = vmatpush1.msra.mxu0 0.0
    %69 = vmatprep.subr.mxu0 0.0
    %70 = vmatpush1.msra.mxu0 0.0
    %71 = vmatprep.subr.mxu0 0.0
    %72 = vmatpush1.msra.mxu0 0.0
    %73 = vmatprep.subr.mxu0 0.0
    %74 = vmatpush1.msra.mxu0 0.0
    %75 = vmatprep.subr.mxu0 0.0
    %76 = vmatpush1.msra.mxu0 0.0
    %77 = vmatprep.subr.mxu0 0.0
    %78 = vmatpush1.msra.mxu0 0.0
    %79 = vmatprep.subr.mxu0 0.0
    %80 = vmatpush1.msra.mxu0 0.0
    %81 = vmatprep.subr.mxu0 0.0
    %82 = vmatpush1.msra.mxu0 0.0
    %83 = vmatprep.subr.mxu0 0.0
    %84 = vmatpush1.msra.mxu0 0.0
    %85 = vmatprep.subr.mxu0 0.0
    %86 = vmatpush1.msra.mxu0 0.0
    %87 = vmatprep.subr.mxu0 0.0
    %88 = vmatpush1.msra.mxu0 0.0
    %89 = vmatprep.subr.mxu0 0.0
    %90 = vmatpush1.msra.mxu0 0.0
    %91 = vmatprep.subr.mxu0 0.0
    %92 = vmatpush1.msra.mxu0 0.0
    %93 = vmatprep.subr.mxu0 0.0
    %94 = vmatpush1.msra.mxu0 0.0
    %95 = vmatprep.mubr.f32.mxu0 0.0
    %96 = vmatmul.mubr.f32.gmra.mrb[0].mxu0 %v19
    %v97 = vpop.f32.mrb[0].mxu0
    %v98 = vadd.f32 %v16, %v97
    %v99 = vpop.f32.mrb[0].mxu0
    %100 = vmatprep.mubr.f32.mxu0 0.0
    %101 = vmatmul.mubr.f32.gmra.mrb[0].mxu0 %v22
    %v102 = vpop.f32.mrb[0].mxu0
    %v103 = vadd.f32 %v16, %v102
    %v104 = vpop.f32.mrb[0].mxu0
    %105 = vmatprep.mubr.f32.mxu0 0.0
    %106 = vmatmul.mubr.f32.gmra.mrb[0].mxu0 %v25
    %v107 = vpop.f32.mrb[0].mxu0
    %v108 = vadd.f32 %v16, %v107
    %v109 = vpop.f32.mrb[0].mxu0
    %110 = vdwg.mxu0
    %vm111 = vcmask 26624
    %v112 = vsel %vm111, %v98, 0.0
    %113 = vadd.xlane.f32.xlu0 %v112
    %v114 = vpop.xlane.xlu0 %113
    %v115 = vrot.slane %v114, 4
    %v116 = vadd.f32 %v114, %v115
    %v117 = vrot.slane %v116, 2
    %v118 = vadd.f32 %v116, %v117
    %v119 = vrot.slane %v118, 1
    %v120 = vadd.f32 %v118, %v119
    %s121 = vtos %v120
    %v122 = vstv %s121
    %vm123 = vcmp.gt.f32.partialorder %v122, 0.0
    %v124 = vsub.f32 0.0, %v98
    %v125 = vsel %vm123, 1, 0
    %vm126 = vcmp.eq.s32.totalorder %v125, 1
    %v127 = vsel %vm126, %v98, %v124
    %v128 = vadd.f32 %v127, 0.0
    %v129 = vtanh.pop %v128
    %v131 = vrot.slane %v98, 3
    %v133 = vsel %vm111, %v131, 0.0
    %134 = vadd.xlane.f32.xlu0 %v133
    %v135 = vpop.xlane.xlu0 %134
    %v136 = vrot.slane %v135, 4
    %v137 = vadd.f32 %v135, %v136
    %v138 = vrot.slane %v137, 2
    %v139 = vadd.f32 %v137, %v138
    %v140 = vrot.slane %v139, 1
    %v141 = vadd.f32 %v139, %v140
    %s142 = vtos %v141
    %v143 = vstv %s142
    %vm144 = vcmp.gt.f32.partialorder %v143, 0.0
    %v145 = vsel %vm144, 1, 0
    %vm146 = vcmp.eq.s32.totalorder %v145, 1
    %v147 = vsel %vm146, %v98, %v124
    %v149 = vrot.slane %v129, 5
    %v151 = vadd.f32 %v147, %v149
    %v152 = vtanh.pop %v151
    %vm154 = vcmask 1041408
    %v155 = vrot.slane %v98, 6
    %v156 = vrot.slane %v103, 6
    %v157 = vsel %vm154, %v155, %v156
    %v159 = vsel %vm111, %v157, 0.0
    %160 = vadd.xlane.f32.xlu0 %v159
    %v161 = vpop.xlane.xlu0 %160
    %v162 = vrot.slane %v161, 4
    %v163 = vadd.f32 %v161, %v162
    %v164 = vrot.slane %v163, 2
    %v165 = vadd.f32 %v163, %v164
    %v166 = vrot.slane %v165, 1
    %v167 = vadd.f32 %v165, %v166
    %s168 = vtos %v167
    %v169 = vstv %s168
    %vm170 = vcmp.gt.f32.partialorder %v169, 0.0
    %v171 = vsub.f32 0.0, %v103
    %v172 = vsel %vm170, 1, 0
    %vm173 = vcmp.eq.s32.totalorder %v172, 1
    %v174 = vsel %vm173, %v98, %v124
    %v175 = vsel %vm173, %v103, %v171
    %v177 = vrot.slane %v152, 5
    %v179 = vadd.f32 %v174, %v177
    %v180 = vadd.f32 %v175, %v177
    %v181 = vtanh.pop %v179
    %v182 = vtanh.pop %v180
    %v183 = vrot.slane %v103, 1
    %v185 = vsel %vm111, %v183, 0.0
    %186 = vadd.xlane.f32.xlu0 %v185
    %v187 = vpop.xlane.xlu0 %186
    %v188 = vrot.slane %v187, 4
    %v189 = vadd.f32 %v187, %v188
    %v190 = vrot.slane %v189, 2
    %v191 = vadd.f32 %v189, %v190
    %v192 = vrot.slane %v191, 1
    %v193 = vadd.f32 %v191, %v192
    %s194 = vtos %v193
    %v195 = vstv %s194
    %vm196 = vcmp.gt.f32.partialorder %v195, 0.0
    %v197 = vsel %vm196, 1, 0
    %vm198 = vcmp.eq.s32.totalorder %v197, 1
    %v199 = vsel %vm198, %v103, %v171
    %vm202 = vcmask 1042432
    %v203 = vrot.slane %v181, 5
    %v204 = vrot.slane %v182, 5
    %v205 = vsel %vm202, %v203, %v204
    %v207 = vadd.f32 %v199, %v205
    %v208 = vtanh.pop %v207
    %v209 = vrot.slane %v103, 4
    %v211 = vsel %vm111, %v209, 0.0
    %212 = vadd.xlane.f32.xlu0 %v211
    %v213 = vpop.xlane.xlu0 %212
    %v214 = vrot.slane %v213, 4
    %v215 = vadd.f32 %v213, %v214
    %v216 = vrot.slane %v215, 2
    %v217 = vadd.f32 %v215, %v216
    %v218 = vrot.slane %v217, 1
    %v219 = vadd.f32 %v217, %v218
    %s220 = vtos %v219
    %v221 = vstv %s220
    %vm222 = vcmp.gt.f32.partialorder %v221, 0.0
    %v223 = vsel %vm222, 1, 0
    %vm224 = vcmp.eq.s32.totalorder %v223, 1
    %v225 = vsel %vm224, %v103, %v171
    %v227 = vrot.slane %v208, 5
    %v229 = vadd.f32 %v225, %v227
    %v230 = vtanh.pop %v229
    %vm232 = vcmask 1040384
    %v233 = vrot.slane %v103, 7
    %v234 = vrot.slane %v108, 7
    %v235 = vsel %vm232, %v233, %v234
    %v237 = vsel %vm111, %v235, 0.0
    %238 = vadd.xlane.f32.xlu0 %v237
    %v239 = vpop.xlane.xlu0 %238
    %v240 = vrot.slane %v239, 4
    %v241 = vadd.f32 %v239, %v240
    %v242 = vrot.slane %v241, 2
    %v243 = vadd.f32 %v241, %v242
    %v244 = vrot.slane %v243, 1
    %v245 = vadd.f32 %v243, %v244
    %s246 = vtos %v245
    %v247 = vstv %s246
    %vm248 = vcmp.gt.f32.partialorder %v247, 0.0
    %v249 = vsub.f32 0.0, %v108
    %v250 = vsel %vm248, 1, 0
    %vm251 = vcmp.eq.s32.totalorder %v250, 1
    %v252 = vsel %vm251, %v103, %v171
    %v253 = vsel %vm251, %v108, %v249
    %v255 = vrot.slane %v230, 5
    %v257 = vadd.f32 %v252, %v255
    %v258 = vadd.f32 %v253, %v255
    %v259 = vtanh.pop %v257
    %v260 = vtanh.pop %v258
    %v261 = vrot.slane %v108, 2
    %v263 = vsel %vm111, %v261, 0.0
    %264 = vadd.xlane.f32.xlu0 %v263
    %v265 = vpop.xlane.xlu0 %264
    %v266 = vrot.slane %v265, 4
    %v267 = vadd.f32 %v265, %v266
    %v268 = vrot.slane %v267, 2
    %v269 = vadd.f32 %v267, %v268
    %v270 = vrot.slane %v269, 1
    %v271 = vadd.f32 %v269, %v270
    %s272 = vtos %v271
    %v273 = vstv %s272
    %vm274 = vcmp.gt.f32.partialorder %v273, 0.0
    %v275 = vsel %vm274, 1, 0
    %vm276 = vcmp.eq.s32.totalorder %v275, 1
    %v277 = vsel %vm276, %v108, %v249
    %v280 = vrot.slane %v259, 5
    %v281 = vrot.slane %v260, 5
    %v282 = vsel %vm202, %v280, %v281
    %v284 = vadd.f32 %v277, %v282
    %v285 = vtanh.pop %v284
    %v286 = vrot.slane %v108, 5
    %v288 = vsel %vm111, %v286, 0.0
    %289 = vadd.xlane.f32.xlu0 %v288
    %v290 = vpop.xlane.xlu0 %289
    %v291 = vrot.slane %v290, 4
    %v292 = vadd.f32 %v290, %v291
    %v293 = vrot.slane %v292, 2
    %v294 = vadd.f32 %v292, %v293
    %v295 = vrot.slane %v294, 1
    %v296 = vadd.f32 %v294, %v295
    %s297 = vtos %v296
    %v298 = vstv %s297
    %vm299 = vcmp.gt.f32.partialorder %v298, 0.0
    %v300 = vsel %vm299, 1, 0
    %vm301 = vcmp.eq.s32.totalorder %v300, 1
    %v302 = vsel %vm301, %v108, %v249
    %v304 = vrot.slane %v285, 5
    %v306 = vadd.f32 %v302, %v304
    %v307 = vtanh.pop %v306
    %vm308 = vcmask 31749
    %309 = vst.msk [vmem:[#allocation2 - $0x5] sm:$0xe0] %vm308, %v307
    // Predicated region
    $region6: #{tpu_custom_call.1} parent=1 // pred_check
      _
    $region7: #{tpu_custom_call.1} parent=1 // pred_check_branch
      %311 = sbr.rel (0) target = $region9
    $region8: #{tpu_custom_call.1} parent=1 // pred_region
      %s313 = ssub.s32 64, 64
      %314 = vsyncadd [#allocation3], %s313
      %s316 = sshll.u32 [#allocation2], 4
      %s317 = int_to_ptr.vmem [resolvable:$true] %s316
      %319 = dma.vmem_to_hbm [thread:$0]  %s317, 64, %s1, [#allocation3]
    $region9: #{tpu_custom_call.1} parent=1 // pred_fallthru
      _
    // Predicated region
    $region10: #{tpu_custom_call.1} parent=1 // pred_check
      _
    $region11: #{tpu_custom_call.1} parent=1 // pred_check_branch
      %321 = sbr.rel (0) target = $region13
    $region12: #{tpu_custom_call.1} parent=1 // pred_region
      %322 = dma.done [#allocation3], 64
    $region13: #{tpu_custom_call.1} parent=1 // pred_fallthru
      _
    %323 = vsyncpa [#allocation3], 1

</llo_original>
